<compile_context>
chip_gen: v5e
topology: v5e:2x2
jax: 0.10.0
libtpu: 0.0.40
codegen_flags: <defaults>
</compile_context>

<pallas_src>
import functools

import jax
import jax.numpy as jnp
from jax import lax
from jax.experimental import pallas as pl
from jax.experimental.pallas import tpu as pltpu


def _round_up(x, m):
    return ((x + m - 1) // m) * m


def sine_layer_kernel(x_ref, w_ref, b_ref, o_ref, *, omega_0):
    # x_ref: (tm, Kp)   w_ref: (tn, Kp)   b_ref: (1, tn)   o_ref: (tm, tn)
    # Contract last dims of both -> MXU consumes W in native (out, in) layout.
    z = lax.dot_general(
        x_ref[...], w_ref[...],
        dimension_numbers=(((1,), (1,)), ((), ())),
        preferred_element_type=jnp.float32,
    )
    z = z + b_ref[...]                       # (tm, tn) + (1, tn) broadcast, f32
    o_ref[...] = jnp.sin(omega_0 * z).astype(o_ref.dtype)


def sine_layer(x, weight, bias, *, omega_0=30.0, tm=512):
    """x: (M, in_features)  weight: (out, in)  bias: (out,)  -> (M, out), f32."""
    M, K = x.shape
    N, K2 = weight.shape
    assert K == K2, "weight in_features mismatch"
    assert bias.shape == (N,), "bias shape mismatch"

    # ---- tile selection -------------------------------------------------
    K_pad = _round_up(K, 128)
    N_pad128 = _round_up(N, 128)
    if N_pad128 <= 512:
        tn = N_pad128                  # whole (padded) out dim in one lane-dense tile
    else:
        tn = 256
    N_pad = _round_up(N_pad128, tn)

    # Batch tile from a VMEM budget: double-buffered x/W/out tiles + bias.
    vmem_budget = 32 << 20
    fixed_bytes = 4 * (2 * tn * K_pad + 2 * tn)          # W tiles + bias
    per_row_bytes = 4 * (2 * K_pad + 2 * tn)              # x row + out row (x2 buf)
    tm_max = max(8, (vmem_budget - fixed_bytes) // max(per_row_bytes, 1))
    tm = min(tm, tm_max, _round_up(M, 8))
    tm = max(8, (tm // 8) * 8)                            # sublane-aligned
    M_pad = _round_up(M, tm)

    # ---- padding (zero pads are harmless for matmul + bias + sin slice-off) --
    xp = x.astype(jnp.float32)
    wp = weight.astype(jnp.float32)
    bp = bias.astype(jnp.float32)
    if M_pad != M or K_pad != K:
        xp = jnp.pad(xp, ((0, M_pad - M), (0, K_pad - K)))
    if N_pad != N or K_pad != K:
        wp = jnp.pad(wp, ((0, N_pad - N), (0, K_pad - K)))
    if N_pad != N:
        bp = jnp.pad(bp, (0, N_pad - N))
    bp2d = bp.reshape(1, N_pad)

    grid = (M_pad // tm, N_pad // tn)

    # Actual double-buffered tile footprint -> explicit, v7x-safe limit.
    tile_bytes = 4 * (2 * tm * K_pad + 2 * tn * K_pad + 2 * tn + 2 * tm * tn)
    vmem_limit = int(min(max(tile_bytes + (1 << 20), 16 << 20), 48 << 20))

    kernel = functools.partial(sine_layer_kernel, omega_0=float(omega_0))

    out = pl.pallas_call(
        kernel,
        out_shape=jax.ShapeDtypeStruct((M_pad, N_pad), jnp.float32),
        grid_spec=pltpu.PrefetchScalarGridSpec(
            num_scalar_prefetch=0,
            grid=grid,
            in_specs=[
                pl.BlockSpec((tm, K_pad), lambda i, j: (i, 0)),   # x tile
                pl.BlockSpec((tn, K_pad), lambda i, j: (j, 0)),   # W tile (out, in)
                pl.BlockSpec((1, tn), lambda i, j: (0, j)),       # bias tile
            ],
            out_specs=pl.BlockSpec((tm, tn), lambda i, j: (i, j)),
        ),
        compiler_params=pltpu.CompilerParams(
            dimension_semantics=("parallel", "parallel"),
            vmem_limit_bytes=vmem_limit,
        ),
    )(xp, wp, bp2d)

    return out[:M, :N]


def init_sine_layer_params(key, in_features, out_features, *, is_first=False,
                           omega_0=30.0):
    """Deterministic SIREN init matching SineLayer.init_weights + nn.Linear bias."""
    kw, kb = jax.random.split(key)
    if is_first:
        bound_w = 1.0 / in_features
    else:
        bound_w = jnp.sqrt(6.0 / in_features) / omega_0
    weight = jax.random.uniform(
        kw, (out_features, in_features), jnp.float32, -bound_w, bound_w
    )
    # nn.Linear default bias init: U(-1/sqrt(fan_in), 1/sqrt(fan_in))
    bound_b = 1.0 / jnp.sqrt(in_features)
    bias = jax.random.uniform(
        kb, (out_features,), jnp.float32, -bound_b, bound_b
    )
    return weight, bias


if __name__ == "__main__":
    key = jax.random.PRNGKey(0)
    k_x, k_p = jax.random.split(key)

    batch = 64
    in_features = 32
    out_features = 32
    omega_0 = 30.0
    is_first = True

    x = jax.random.uniform(k_x, (batch, in_features), jnp.float32, -1.0, 1.0)
    weight, bias = init_sine_layer_params(
        k_p, in_features, out_features, is_first=is_first, omega_0=omega_0
    )

    y = sine_layer(x, weight, bias, omega_0=omega_0)
    y = jax.block_until_ready(y)

    # Reference check in plain JAX (same math as the PyTorch module).
    y_ref = jnp.sin(omega_0 * (x @ weight.T + bias))
    assert y.shape == y_ref.shape
    assert jnp.allclose(y, y_ref, atol=1e-5, rtol=1e-5), "mismatch vs reference"

    print("KERNEL_OK")
</pallas_src>

<mosaic_0001>
module attributes {stable_mosaic.version = 11 : i64} {
  func.func @sine_layer_kernel(%arg0: i32, %arg1: i32, %arg2: memref<64x128xf32, #tpu.memory_space<vmem>>, %arg3: memref<128x128xf32, #tpu.memory_space<vmem>>, %arg4: memref<1x128xf32, #tpu.memory_space<vmem>>, %arg5: memref<64x128xf32, #tpu.memory_space<vmem>>) attributes {dimension_semantics = [#tpu.dimension_semantics<parallel>, #tpu.dimension_semantics<parallel>], iteration_bounds = array<i64: 1, 1>, scalar_prefetch = 0 : i64, scratch_operands = 0 : i64, tpu.core_type = #tpu.core_type<tc>, window_params = [{transform_indices = @transform_0, window_bounds = array<i64: 64, 128>}, {transform_indices = @transform_1, window_bounds = array<i64: 128, 128>}, {transform_indices = @transform_2, window_bounds = array<i64: 1, 128>}, {transform_indices = @transform_3, window_bounds = array<i64: 64, 128>}]} {
    %c0 = arith.constant 0 : index
    %c0_0 = arith.constant 0 : index
    %0 = vector.load %arg2[%c0, %c0_0] : memref<64x128xf32, #tpu.memory_space<vmem>>, vector<64x128xf32>
    %c0_1 = arith.constant 0 : index
    %c0_2 = arith.constant 0 : index
    %1 = vector.load %arg3[%c0_1, %c0_2] : memref<128x128xf32, #tpu.memory_space<vmem>>, vector<128x128xf32>
    %cst = arith.constant dense<0.000000e+00> : vector<64x128xf32>
    %2 = tpu.matmul %0, %1, %cst {dimension_numbers = #tpu.dot_dimension_numbers<[1], [1], [0], [0], [0, 0, 1, 0], [], []>} : vector<64x128xf32>, vector<128x128xf32>, vector<64x128xf32> -> vector<64x128xf32>
    %c0_3 = arith.constant 0 : index
    %c0_4 = arith.constant 0 : index
    %3 = vector.load %arg4[%c0_3, %c0_4] : memref<1x128xf32, #tpu.memory_space<vmem>>, vector<1x128xf32>
    %4 = vector.broadcast %3 : vector<1x128xf32> to vector<64x128xf32>
    %5 = arith.addf %2, %4 : vector<64x128xf32>
    %cst_5 = arith.constant 3.000000e+01 : f32
    %6 = vector.broadcast %cst_5 : f32 to vector<64x128xf32>
    %7 = arith.mulf %6, %5 : vector<64x128xf32>
    %8 = math.sin %7 : vector<64x128xf32>
    %c0_6 = arith.constant 0 : index
    %c0_7 = arith.constant 0 : index
    %9 = vector.load %arg5[%c0_6, %c0_7] : memref<64x128xf32, #tpu.memory_space<vmem>>, vector<64x128xf32>
    tpu.vector_store %arg5[%c0_6, %c0_7], %8 {strides = array<i32>} : memref<64x128xf32, #tpu.memory_space<vmem>>, vector<64x128xf32>,
    return
  }
  func.func @transform_0(%arg0: i32, %arg1: i32) -> (i32, i32) {
    %c0_i32 = arith.constant 0 : i32
    %c0_i32_0 = arith.constant 0 : i32
    return %arg0, %c0_i32 : i32, i32
  }
  func.func @transform_1(%arg0: i32, %arg1: i32) -> (i32, i32) {
    %c0_i32 = arith.constant 0 : i32
    %c0_i32_0 = arith.constant 0 : i32
    return %arg1, %c0_i32 : i32, i32
  }
  func.func @transform_2(%arg0: i32, %arg1: i32) -> (i32, i32) {
    %c0_i32 = arith.constant 0 : i32
    %c0_i32_0 = arith.constant 0 : i32
    return %c0_i32, %arg1 : i32, i32
  }
  func.func @transform_3(%arg0: i32, %arg1: i32) -> (i32, i32) {
    %c0_i32 = arith.constant 0 : i32
    return %arg0, %arg1 : i32, i32
  }
}

</mosaic_0001>

<llo_original>
// kernel: tpu_custom_call.1
$region0: #{tpu_custom_call.1}
  #allocation0 [shape = 'u32[]', space=smem, size = 0x4, offset = 0x4, fixed_abs, tag = 'smem constant byte address 0x4 - core index']
  #allocation1 [shape = 'u32[72,128]{1,0:T(1,128)}', space=vmem, size = 0x9000, scoped, tag = 'internal scratch']
  %s0 = inlined_call_operand.hbm [shape: f32[64,128], index: 0, kind: input, shape index: {}]
  %s1 = inlined_call_operand.hbm [shape: f32[128,128], index: 1, kind: input, shape index: {}]
  %s2 = inlined_call_operand.vmem [shape: f32[1,128], index: 2, kind: input, shape index: {}]
  %s3 = inlined_call_operand.hbm [shape: f32[64,128], index: 3, kind: output, shape index: {}]
  %s4 = sld [smem:[#allocation0]]
  $region30: #{tpu_custom_call.1} parent=0
    _
  %s6 = ssub.s32 1, %s4
  %s7 = scalar_select 0, %s6, %s4
  $region1: #{tpu_custom_call.1} parent=0
    #allocation2 [shape = 'u8[32768]{0}', space=vmem, size = 0x8000, scoped, tag = 'input window, operand 0, single buffered']
    #allocation3 [shape = 's32[1]{0}', space=sflag, size = 0x4, scoped, tag = 'scoped memory for tpu_custom_call.1']
    #allocation4 [shape = 's32[1]{0}', space=sflag, size = 0x4, scoped, tag = 'scoped memory for tpu_custom_call.1']
    #allocation5 [shape = 'u8[65536]{0}', space=vmem, size = 0x10000, scoped, tag = 'input window, operand 1, single buffered']
    #allocation6 [shape = 's32[1]{0}', space=sflag, size = 0x4, scoped, tag = 'scoped memory for tpu_custom_call.1']
    #allocation7 [shape = 'u8[32768]{0}', space=vmem, size = 0x8000, scoped, tag = 'output window, operand 0, single buffered']
    %8 = vsyncpa [#allocation3], 0
    %9 = vsyncpa [#allocation6], 0
    %10 = vsyncpa [#allocation4], 0
    // Predicated region
    $region2: #{tpu_custom_call.1} parent=1 // pred_check
      _
    $region3: #{tpu_custom_call.1} parent=1 // pred_check_branch
      %12 = sbr.rel (0) target = $region5
    $region4: #{tpu_custom_call.1} parent=1 // pred_region
      %14 = vsyncadd [#allocation3], 0
      %s15 = sshll.u32 %s0, 4
      %s16 = int_to_ptr.hbm [resolvable:$true] %s15
      %s17 = sshll.u32 [#allocation2], 4
      %s18 = int_to_ptr.vmem [resolvable:$true] %s17
      %23 = dma.hbm_to_vmem [thread:$0]  %s16, 1024, %s18, [#allocation3], 128, 128, 8
    $region5: #{tpu_custom_call.1} parent=1 // pred_fallthru
      _
    // Predicated region
    $region6: #{tpu_custom_call.1} parent=1 // pred_check
      _
    $region7: #{tpu_custom_call.1} parent=1 // pred_check_branch
      %25 = sbr.rel (0) target = $region9
    $region8: #{tpu_custom_call.1} parent=1 // pred_region
      %27 = vsyncadd [#allocation6], 0
      %s28 = sshll.u32 %s1, 4
      %s29 = int_to_ptr.hbm [resolvable:$true] %s28
      %s30 = sshll.u32 [#allocation5], 4
      %s31 = int_to_ptr.vmem [resolvable:$true] %s30
      %36 = dma.hbm_to_vmem [thread:$0]  %s29, 2048, %s31, [#allocation6], 128, 128, 8
    $region9: #{tpu_custom_call.1} parent=1 // pred_fallthru
      _
    // Predicated region
    $region10: #{tpu_custom_call.1} parent=1 // pred_check
      _
    $region11: #{tpu_custom_call.1} parent=1 // pred_check_branch
      %38 = sbr.rel (0) target = $region13
    $region12: #{tpu_custom_call.1} parent=1 // pred_region
      _
    $region13: #{tpu_custom_call.1} parent=1 // pred_fallthru
      _
    // Predicated region
    $region14: #{tpu_custom_call.1} parent=1 // pred_check
      _
    $region15: #{tpu_custom_call.1} parent=1 // pred_check_branch
      %40 = sbr.rel (0) target = $region17
    $region16: #{tpu_custom_call.1} parent=1 // pred_region
      %42 = dma.done [#allocation3], 1024
    $region17: #{tpu_custom_call.1} parent=1 // pred_fallthru
      _
    // Predicated region
    $region18: #{tpu_custom_call.1} parent=1 // pred_check
      _
    $region19: #{tpu_custom_call.1} parent=1 // pred_check_branch
      %44 = sbr.rel (0) target = $region21
    $region20: #{tpu_custom_call.1} parent=1 // pred_region
      %46 = dma.done [#allocation6], 2048
    $region21: #{tpu_custom_call.1} parent=1 // pred_fallthru
      _
    %v47 = vld [vmem:[#allocation2] sm:$0xff]
    %v48 = vld [vmem:[#allocation2 + $0x8] sm:$0xff]
    %v49 = vld [vmem:[#allocation2 + $0x10] sm:$0xff]
    %v50 = vld [vmem:[#allocation2 + $0x18] sm:$0xff]
    %v51 = vld [vmem:[#allocation2 + $0x20] sm:$0xff]
    %v52 = vld [vmem:[#allocation2 + $0x28] sm:$0xff]
    %v53 = vld [vmem:[#allocation2 + $0x30] sm:$0xff]
    %v54 = vld [vmem:[#allocation2 + $0x38] sm:$0xff]
    %v55 = vld [vmem:[#allocation5] sm:$0xff]
    %v56 = vld [vmem:[#allocation5 + $0x8] sm:$0xff]
    %v57 = vld [vmem:[#allocation5 + $0x10] sm:$0xff]
    %v58 = vld [vmem:[#allocation5 + $0x18] sm:$0xff]
    %v59 = vld [vmem:[#allocation5 + $0x20] sm:$0xff]
    %v60 = vld [vmem:[#allocation5 + $0x28] sm:$0xff]
    %v61 = vld [vmem:[#allocation5 + $0x30] sm:$0xff]
    %v62 = vld [vmem:[#allocation5 + $0x38] sm:$0xff]
    %v63 = vld [vmem:[#allocation5 + $0x40] sm:$0xff]
    %v64 = vld [vmem:[#allocation5 + $0x48] sm:$0xff]
    %v65 = vld [vmem:[#allocation5 + $0x50] sm:$0xff]
    %v66 = vld [vmem:[#allocation5 + $0x58] sm:$0xff]
    %v67 = vld [vmem:[#allocation5 + $0x60] sm:$0xff]
    %v68 = vld [vmem:[#allocation5 + $0x68] sm:$0xff]
    %v69 = vld [vmem:[#allocation5 + $0x70] sm:$0xff]
    %v70 = vld [vmem:[#allocation5 + $0x78] sm:$0xff]
    %v71 = vld [vmem:[%s2] sm:$0x1]
    %v73 = vperm.slane %v71, 0
    %75 = vmatpush.xpose.msra.mxu0 %v70
    %76 = vmatpush.xpose.msra.mxu0 %v69
    %77 = vmatpush.xpose.msra.mxu0 %v68
    %78 = vmatpush.xpose.msra.mxu0 %v67
    %79 = vmatpush.xpose.msra.mxu0 %v66
    %80 = vmatpush.xpose.msra.mxu0 %v65
    %81 = vmatpush.xpose.msra.mxu0 %v64
    %82 = vmatpush.xpose.msra.mxu0 %v63
    %83 = vmatpush.xpose.msra.mxu0 %v62
    %84 = vmatpush.xpose.msra.mxu0 %v61
    %85 = vmatpush.xpose.msra.mxu0 %v60
    %86 = vmatpush.xpose.msra.mxu0 %v59
    %87 = vmatpush.xpose.msra.mxu0 %v58
    %88 = vmatpush.xpose.msra.mxu0 %v57
    %89 = vmatpush.xpose.msra.mxu0 %v56
    %90 = vmatpush.xpose.msra.mxu0 %v55
    %91 = vmatmul.f32.gmra.mxu0 %v47
    %v92 = vpop.f32.mrf.mxu0
    %v93 = vadd.f32 %v73, %v92
    %94 = vmatmul.f32.gmra.mxu0 %v48
    %v95 = vpop.f32.mrf.mxu0
    %v96 = vadd.f32 %v73, %v95
    %97 = vmatmul.f32.gmra.mxu0 %v49
    %v98 = vpop.f32.mrf.mxu0
    %v99 = vadd.f32 %v73, %v98
    %100 = vmatmul.f32.gmra.mxu0 %v50
    %v101 = vpop.f32.mrf.mxu0
    %v102 = vadd.f32 %v73, %v101
    %103 = vmatmul.f32.gmra.mxu0 %v51
    %v104 = vpop.f32.mrf.mxu0
    %v105 = vadd.f32 %v73, %v104
    %106 = vmatmul.f32.gmra.mxu0 %v52
    %v107 = vpop.f32.mrf.mxu0
    %v108 = vadd.f32 %v73, %v107
    %109 = vmatmul.f32.gmra.mxu0 %v53
    %v110 = vpop.f32.mrf.mxu0
    %v111 = vadd.f32 %v73, %v110
    %112 = vmatmul.f32.gmra.mxu0 %v54
    %v113 = vpop.f32.mrf.mxu0
    %v114 = vadd.f32 %v73, %v113
    %115 = vdwg.mxu0
    %v116 = vmul.f32 %v93, 30.0
    %v117 = vmul.f32 %v96, 30.0
    %v118 = vmul.f32 %v99, 30.0
    %v119 = vmul.f32 %v102, 30.0
    %v120 = vmul.f32 %v105, 30.0
    %v121 = vmul.f32 %v108, 30.0
    %v122 = vmul.f32 %v111, 30.0
    %v123 = vmul.f32 %v114, 30.0
    %v124 = vand.u32 2147483647, %v116
    %vm125 = vcmp.le.f32.partialorder %v124, 0.7853982
    %vm126 = vcmp.lt.s32.totalorder %v116, 0
    %v127 = vand.u32 %v116, 2139095040
    %v128 = vshrl.u32 %v127, 23
    %v129 = vsub.s32 %v128, 127
    %v130 = vand.u32 2147483647, %v116
    %v131 = vand.u32 %v130, 8388607
    %v132 = vor.u32 %v131, 8388608
    %v133 = vsub.s32 0, %v132
    %v134 = vadd.s32 %v129, 1
    %vm135 = vcmp.gt.s32.totalorder %v134, 0
    %v136 = vsel %vm135, %v134, 0
    %v137 = vshrl.u32 %v136, 5
    %v138 = vand.u32 %v136, 31
    %v139 = vsub.s32 32, %v138
    %v140 = vshrl.u32 683565275, %v139
    %v141 = vshll.u32 683565275, %v138
    %v142 = vshrl.u32 2475754826, %v139
    %v143 = vor.u32 %v141, %v142
    %v144 = vshll.u32 2475754826, %v138
    %v145 = vshrl.u32 2131351028, %v139
    %v146 = vor.u32 %v144, %v145
    %v147 = vshll.u32 2131351028, %v138
    %v148 = vshrl.u32 2102212464, %v139
    %v149 = vor.u32 %v147, %v148
    %v150 = vshll.u32 2102212464, %v138
    %v151 = vshrl.u32 920167782, %v139
    %v152 = vor.u32 %v150, %v151
    %v153 = vshll.u32 920167782, %v138
    %v154 = vshrl.u32 1326507024, %v139
    %v155 = vor.u32 %v153, %v154
    %vm156 = vcmp.lt.s32.totalorder %v137, 1
    %vm157 = vcmp.lt.s32.totalorder %v137, 2
    %vm158 = vcmp.lt.s32.totalorder %v137, 3
    %vm159 = vcmp.lt.s32.totalorder %v137, 4
    %v160 = vsel %vm156, %v140, %v143
    %v161 = vsel %vm159, %v149, 2102212464
    %v162 = vsel %vm158, %v146, %v161
    %v163 = vsel %vm157, %v160, %v162
    %v164 = vsel %vm156, %v143, %v146
    %v165 = vsel %vm159, %v152, 920167782
    %v166 = vsel %vm158, %v149, %v165
    %v167 = vsel %vm157, %v164, %v166
    %v168 = vsel %vm156, %v146, %v149
    %v169 = vsel %vm159, %v155, 1326507024
    %v170 = vsel %vm158, %v152, %v169
    %v171 = vsel %vm157, %v168, %v170
    %v172 = vshll.u32 %v132, 8
    %v173 = vand.u32 %v172, 65535
    %v174 = vshrl.u32 %v172, 16
    %v175 = vand.u32 %v171, 65535
    %v176 = vshrl.u32 %v171, 16
    %v177 = vmul.u32 %v173, %v175
    %v178 = vmul.u32 %v173, %v176
    %v179 = vmul.u32 %v174, %v175
    %v180 = vmul.u32 %v174, %v176
    %v181 = vshll.u32 %v178, 16
    %v182 = vshrl.u32 %v178, 16
    %v183 = vshll.u32 %v179, 16
    %v184 = vshrl.u32 %v179, 16
    %vm185 = vc.u32 %v177, %v181
    %v186 = vsel %vm185, 1, 0
    %v187 = vadd.s32 %v177, %v181
    %v188 = vadd.s32 %v180, %v186
    %vm189 = vc.u32 %v187, %v183
    %v190 = vsel %vm189, 1, 0
    %v191 = vadd.s32 %v187, %v183
    %v192 = vadd.s32 %v188, %v190
    %v193 = vadd.s32 %v192, %v182
    %v194 = vadd.s32 %v193, %v184
    %v195 = vand.u32 %v172, 65535
    %v196 = vshrl.u32 %v172, 16
    %v197 = vand.u32 %v167, 65535
    %v198 = vshrl.u32 %v167, 16
    %v199 = vmul.u32 %v195, %v197
    %v200 = vmul.u32 %v195, %v198
    %v201 = vmul.u32 %v196, %v197
    %v202 = vmul.u32 %v196, %v198
    %v203 = vshll.u32 %v200, 16
    %v204 = vshrl.u32 %v200, 16
    %v205 = vshll.u32 %v201, 16
    %v206 = vshrl.u32 %v201, 16
    %vm207 = vc.u32 %v199, %v203
    %v208 = vsel %vm207, 1, 0
    %v209 = vadd.s32 %v199, %v203
    %v210 = vadd.s32 %v202, %v208
    %vm211 = vc.u32 %v209, %v205
    %v212 = vsel %vm211, 1, 0
    %v213 = vadd.s32 %v209, %v205
    %v214 = vadd.s32 %v210, %v212
    %v215 = vadd.s32 %v214, %v204
    %v216 = vadd.s32 %v215, %v206
    %v217 = vmul.u32 %v172, %v163
    %v218 = vadd.s32 %v194, %v213
    %vm219 = vc.u32 %v194, %v213
    %v220 = vadd.s32 %v216, 1
    %v221 = vsel %vm219, %v220, %v216
    %v222 = vadd.s32 %v217, %v221
    %v223 = vadd.s32 %v222, 536870912
    %v224 = vshrl.u32 %v223, 30
    %v225 = vshll.u32 %v224, 30
    %v226 = vsub.s32 %v222, %v225
    %vm227 = vcmp.lt.s32.totalorder %v226, 0
    %v228 = vsub.s32 0, %v226
    %v229 = vsel %vm227, %v228, %v226
    %v230 = vclz %v229
    %v231 = vsub.s32 %v230, 2
    %vm232 = vcmp.gt.s32.totalorder 0, %v231
    %v233 = vsel %vm232, 0, %v231
    %v234 = vsub.s32 32, %v233
    %v235 = vshll.u32 %v226, %v233
    %v236 = vshrl.u32 %v218, %v234
    %v237 = vor.u32 %v235, %v236
    %v238 = vsub.s32 4294967266, %v233
    %v239 = vadd.s32 %v238, 127
    %v240 = vshll.u32 %v239, 23
    %v241 = vor.u32 4788187, %v240
    %v242 = vand.u32 2147483647, %v241
    %v244 = vcvt.s32.f32 %v237
    %v245 = vmul.f32 %v244, %v242
    %v246 = vxor.u32 %v245, 2147483648
    %v247 = vsel %vm126, %v246, %v245
    %v248 = vsub.s32 4, %v224
    %v249 = vsel %vm126, %v248, %v224
    %v250 = vsel %vm125, %v116, %v247
    %v251 = vsel %vm125, 0, %v249
    %v252 = vmul.f32 %v250, %v250
    %v253 = vmul.f32 %v252, -0.001358992
    %v254 = vadd.f32 %v253, 0.041655596
    %v255 = vmul.f32 %v252, %v254
    %v256 = vadd.f32 %v255, -0.4999988
    %v257 = vmul.f32 %v252, %v256
    %v258 = vadd.f32 1.0, %v257
    %v259 = vmul.f32 %v250, %v250
    %v260 = vmul.f32 %v259, -0.00019511016
    %v261 = vadd.f32 %v260, 0.008332121
    %v262 = vmul.f32 %v259, %v261
    %v263 = vadd.f32 %v262, -0.16666654
    %v264 = vmul.f32 %v259, %v263
    %v265 = vadd.f32 %v264, 1.0
    %v266 = vmul.f32 %v265, %v250
    %vm267 = vweird.f32 %v116
    %v268 = vadd.s32 %v251, 3
    %v269 = vand.u32 %v268, 3
    %vm270 = vcmp.lt.s32.totalorder %v269, 2
    %vm271 = vcmp.eq.s32.totalorder %v269, 0
    %v272 = vxor.u32 %v266, 2147483648
    %v273 = vsel %vm271, %v258, %v272
    %vm274 = vcmp.eq.s32.totalorder %v269, 2
    %v275 = vxor.u32 %v258, 2147483648
    %v276 = vsel %vm274, %v275, %v266
    %v277 = vsel %vm270, %v273, %v276
    %v278 = vsel %vm267, nan, %v277
    %v279 = vand.u32 2147483647, %v117
    %vm280 = vcmp.le.f32.partialorder %v279, 0.7853982
    %vm281 = vcmp.lt.s32.totalorder %v117, 0
    %v282 = vand.u32 %v117, 2139095040
    %v283 = vshrl.u32 %v282, 23
    %v284 = vsub.s32 %v283, 127
    %v285 = vand.u32 2147483647, %v117
    %v286 = vand.u32 %v285, 8388607
    %v287 = vor.u32 %v286, 8388608
    %v288 = vsub.s32 0, %v287
    %v289 = vadd.s32 %v284, 1
    %vm290 = vcmp.gt.s32.totalorder %v289, 0
    %v291 = vsel %vm290, %v289, 0
    %v292 = vshrl.u32 %v291, 5
    %v293 = vand.u32 %v291, 31
    %v294 = vsub.s32 32, %v293
    %v295 = vshrl.u32 683565275, %v294
    %v296 = vshll.u32 683565275, %v293
    %v297 = vshrl.u32 2475754826, %v294
    %v298 = vor.u32 %v296, %v297
    %v299 = vshll.u32 2475754826, %v293
    %v300 = vshrl.u32 2131351028, %v294
    %v301 = vor.u32 %v299, %v300
    %v302 = vshll.u32 2131351028, %v293
    %v303 = vshrl.u32 2102212464, %v294
    %v304 = vor.u32 %v302, %v303
    %v305 = vshll.u32 2102212464, %v293
    %v306 = vshrl.u32 920167782, %v294
    %v307 = vor.u32 %v305, %v306
    %v308 = vshll.u32 920167782, %v293
    %v309 = vshrl.u32 1326507024, %v294
    %v310 = vor.u32 %v308, %v309
    %vm311 = vcmp.lt.s32.totalorder %v292, 1
    %vm312 = vcmp.lt.s32.totalorder %v292, 2
    %vm313 = vcmp.lt.s32.totalorder %v292, 3
    %vm314 = vcmp.lt.s32.totalorder %v292, 4
    %v315 = vsel %vm311, %v295, %v298
    %v316 = vsel %vm314, %v304, 2102212464
    %v317 = vsel %vm313, %v301, %v316
    %v318 = vsel %vm312, %v315, %v317
    %v319 = vsel %vm311, %v298, %v301
    %v320 = vsel %vm314, %v307, 920167782
    %v321 = vsel %vm313, %v304, %v320
    %v322 = vsel %vm312, %v319, %v321
    %v323 = vsel %vm311, %v301, %v304
    %v324 = vsel %vm314, %v310, 1326507024
    %v325 = vsel %vm313, %v307, %v324
    %v326 = vsel %vm312, %v323, %v325
    %v327 = vshll.u32 %v287, 8
    %v328 = vand.u32 %v327, 65535
    %v329 = vshrl.u32 %v327, 16
    %v330 = vand.u32 %v326, 65535
    %v331 = vshrl.u32 %v326, 16
    %v332 = vmul.u32 %v328, %v330
    %v333 = vmul.u32 %v328, %v331
    %v334 = vmul.u32 %v329, %v330
    %v335 = vmul.u32 %v329, %v331
    %v336 = vshll.u32 %v333, 16
    %v337 = vshrl.u32 %v333, 16
    %v338 = vshll.u32 %v334, 16
    %v339 = vshrl.u32 %v334, 16
    %vm340 = vc.u32 %v332, %v336
    %v341 = vsel %vm340, 1, 0
    %v342 = vadd.s32 %v332, %v336
    %v343 = vadd.s32 %v335, %v341
    %vm344 = vc.u32 %v342, %v338
    %v345 = vsel %vm344, 1, 0
    %v346 = vadd.s32 %v342, %v338
    %v347 = vadd.s32 %v343, %v345
    %v348 = vadd.s32 %v347, %v337
    %v349 = vadd.s32 %v348, %v339
    %v350 = vand.u32 %v327, 65535
    %v351 = vshrl.u32 %v327, 16
    %v352 = vand.u32 %v322, 65535
    %v353 = vshrl.u32 %v322, 16
    %v354 = vmul.u32 %v350, %v352
    %v355 = vmul.u32 %v350, %v353
    %v356 = vmul.u32 %v351, %v352
    %v357 = vmul.u32 %v351, %v353
    %v358 = vshll.u32 %v355, 16
    %v359 = vshrl.u32 %v355, 16
    %v360 = vshll.u32 %v356, 16
    %v361 = vshrl.u32 %v356, 16
    %vm362 = vc.u32 %v354, %v358
    %v363 = vsel %vm362, 1, 0
    %v364 = vadd.s32 %v354, %v358
    %v365 = vadd.s32 %v357, %v363
    %vm366 = vc.u32 %v364, %v360
    %v367 = vsel %vm366, 1, 0
    %v368 = vadd.s32 %v364, %v360
    %v369 = vadd.s32 %v365, %v367
    %v370 = vadd.s32 %v369, %v359
    %v371 = vadd.s32 %v370, %v361
    %v372 = vmul.u32 %v327, %v318
    %v373 = vadd.s32 %v349, %v368
    %vm374 = vc.u32 %v349, %v368
    %v375 = vadd.s32 %v371, 1
    %v376 = vsel %vm374, %v375, %v371
    %v377 = vadd.s32 %v372, %v376
    %v378 = vadd.s32 %v377, 536870912
    %v379 = vshrl.u32 %v378, 30
    %v380 = vshll.u32 %v379, 30
    %v381 = vsub.s32 %v377, %v380
    %vm382 = vcmp.lt.s32.totalorder %v381, 0
    %v383 = vsub.s32 0, %v381
    %v384 = vsel %vm382, %v383, %v381
    %v385 = vclz %v384
    %v386 = vsub.s32 %v385, 2
    %vm387 = vcmp.gt.s32.totalorder 0, %v386
    %v388 = vsel %vm387, 0, %v386
    %v389 = vsub.s32 32, %v388
    %v390 = vshll.u32 %v381, %v388
    %v391 = vshrl.u32 %v373, %v389
    %v392 = vor.u32 %v390, %v391
    %v393 = vsub.s32 4294967266, %v388
    %v394 = vadd.s32 %v393, 127
    %v395 = vshll.u32 %v394, 23
    %v396 = vor.u32 4788187, %v395
    %v397 = vand.u32 2147483647, %v396
    %v399 = vcvt.s32.f32 %v392
    %v400 = vmul.f32 %v399, %v397
    %v401 = vxor.u32 %v400, 2147483648
    %v402 = vsel %vm281, %v401, %v400
    %v403 = vsub.s32 4, %v379
    %v404 = vsel %vm281, %v403, %v379
    %v405 = vsel %vm280, %v117, %v402
    %v406 = vsel %vm280, 0, %v404
    %v407 = vmul.f32 %v405, %v405
    %v408 = vmul.f32 %v407, -0.001358992
    %v409 = vadd.f32 %v408, 0.041655596
    %v410 = vmul.f32 %v407, %v409
    %v411 = vadd.f32 %v410, -0.4999988
    %v412 = vmul.f32 %v407, %v411
    %v413 = vadd.f32 1.0, %v412
    %v414 = vmul.f32 %v405, %v405
    %v415 = vmul.f32 %v414, -0.00019511016
    %v416 = vadd.f32 %v415, 0.008332121
    %v417 = vmul.f32 %v414, %v416
    %v418 = vadd.f32 %v417, -0.16666654
    %v419 = vmul.f32 %v414, %v418
    %v420 = vadd.f32 %v419, 1.0
    %v421 = vmul.f32 %v420, %v405
    %vm422 = vweird.f32 %v117
    %v423 = vadd.s32 %v406, 3
    %v424 = vand.u32 %v423, 3
    %vm425 = vcmp.lt.s32.totalorder %v424, 2
    %vm426 = vcmp.eq.s32.totalorder %v424, 0
    %v427 = vxor.u32 %v421, 2147483648
    %v428 = vsel %vm426, %v413, %v427
    %vm429 = vcmp.eq.s32.totalorder %v424, 2
    %v430 = vxor.u32 %v413, 2147483648
    %v431 = vsel %vm429, %v430, %v421
    %v432 = vsel %vm425, %v428, %v431
    %v433 = vsel %vm422, nan, %v432
    %v434 = vand.u32 2147483647, %v118
    %vm435 = vcmp.le.f32.partialorder %v434, 0.7853982
    %vm436 = vcmp.lt.s32.totalorder %v118, 0
    %v437 = vand.u32 %v118, 2139095040
    %v438 = vshrl.u32 %v437, 23
    %v439 = vsub.s32 %v438, 127
    %v440 = vand.u32 2147483647, %v118
    %v441 = vand.u32 %v440, 8388607
    %v442 = vor.u32 %v441, 8388608
    %v443 = vsub.s32 0, %v442
    %v444 = vadd.s32 %v439, 1
    %vm445 = vcmp.gt.s32.totalorder %v444, 0
    %v446 = vsel %vm445, %v444, 0
    %v447 = vshrl.u32 %v446, 5
    %v448 = vand.u32 %v446, 31
    %v449 = vsub.s32 32, %v448
    %v450 = vshrl.u32 683565275, %v449
    %v451 = vshll.u32 683565275, %v448
    %v452 = vshrl.u32 2475754826, %v449
    %v453 = vor.u32 %v451, %v452
    %v454 = vshll.u32 2475754826, %v448
    %v455 = vshrl.u32 2131351028, %v449
    %v456 = vor.u32 %v454, %v455
    %v457 = vshll.u32 2131351028, %v448
    %v458 = vshrl.u32 2102212464, %v449
    %v459 = vor.u32 %v457, %v458
    %v460 = vshll.u32 2102212464, %v448
    %v461 = vshrl.u32 920167782, %v449
    %v462 = vor.u32 %v460, %v461
    %v463 = vshll.u32 920167782, %v448
    %v464 = vshrl.u32 1326507024, %v449
    %v465 = vor.u32 %v463, %v464
    %vm466 = vcmp.lt.s32.totalorder %v447, 1
    %vm467 = vcmp.lt.s32.totalorder %v447, 2
    %vm468 = vcmp.lt.s32.totalorder %v447, 3
    %vm469 = vcmp.lt.s32.totalorder %v447, 4
    %v470 = vsel %vm466, %v450, %v453
    %v471 = vsel %vm469, %v459, 2102212464
    %v472 = vsel %vm468, %v456, %v471
    %v473 = vsel %vm467, %v470, %v472
    %v474 = vsel %vm466, %v453, %v456
    %v475 = vsel %vm469, %v462, 920167782
    %v476 = vsel %vm468, %v459, %v475
    %v477 = vsel %vm467, %v474, %v476
    %v478 = vsel %vm466, %v456, %v459
    %v479 = vsel %vm469, %v465, 1326507024
    %v480 = vsel %vm468, %v462, %v479
    %v481 = vsel %vm467, %v478, %v480
    %v482 = vshll.u32 %v442, 8
    %v483 = vand.u32 %v482, 65535
    %v484 = vshrl.u32 %v482, 16
    %v485 = vand.u32 %v481, 65535
    %v486 = vshrl.u32 %v481, 16
    %v487 = vmul.u32 %v483, %v485
    %v488 = vmul.u32 %v483, %v486
    %v489 = vmul.u32 %v484, %v485
    %v490 = vmul.u32 %v484, %v486
    %v491 = vshll.u32 %v488, 16
    %v492 = vshrl.u32 %v488, 16
    %v493 = vshll.u32 %v489, 16
    %v494 = vshrl.u32 %v489, 16
    %vm495 = vc.u32 %v487, %v491
    %v496 = vsel %vm495, 1, 0
    %v497 = vadd.s32 %v487, %v491
    %v498 = vadd.s32 %v490, %v496
    %vm499 = vc.u32 %v497, %v493
    %v500 = vsel %vm499, 1, 0
    %v501 = vadd.s32 %v497, %v493
    %v502 = vadd.s32 %v498, %v500
    %v503 = vadd.s32 %v502, %v492
    %v504 = vadd.s32 %v503, %v494
    %v505 = vand.u32 %v482, 65535
    %v506 = vshrl.u32 %v482, 16
    %v507 = vand.u32 %v477, 65535
    %v508 = vshrl.u32 %v477, 16
    %v509 = vmul.u32 %v505, %v507
    %v510 = vmul.u32 %v505, %v508
    %v511 = vmul.u32 %v506, %v507
    %v512 = vmul.u32 %v506, %v508
    %v513 = vshll.u32 %v510, 16
    %v514 = vshrl.u32 %v510, 16
    %v515 = vshll.u32 %v511, 16
    %v516 = vshrl.u32 %v511, 16
    %vm517 = vc.u32 %v509, %v513
    %v518 = vsel %vm517, 1, 0
    %v519 = vadd.s32 %v509, %v513
    %v520 = vadd.s32 %v512, %v518
    %vm521 = vc.u32 %v519, %v515
    %v522 = vsel %vm521, 1, 0
    %v523 = vadd.s32 %v519, %v515
    %v524 = vadd.s32 %v520, %v522
    %v525 = vadd.s32 %v524, %v514
    %v526 = vadd.s32 %v525, %v516
    %v527 = vmul.u32 %v482, %v473
    %v528 = vadd.s32 %v504, %v523
    %vm529 = vc.u32 %v504, %v523
    %v530 = vadd.s32 %v526, 1
    %v531 = vsel %vm529, %v530, %v526
    %v532 = vadd.s32 %v527, %v531
    %v533 = vadd.s32 %v532, 536870912
    %v534 = vshrl.u32 %v533, 30
    %v535 = vshll.u32 %v534, 30
    %v536 = vsub.s32 %v532, %v535
    %vm537 = vcmp.lt.s32.totalorder %v536, 0
    %v538 = vsub.s32 0, %v536
    %v539 = vsel %vm537, %v538, %v536
    %v540 = vclz %v539
    %v541 = vsub.s32 %v540, 2
    %vm542 = vcmp.gt.s32.totalorder 0, %v541
    %v543 = vsel %vm542, 0, %v541
    %v544 = vsub.s32 32, %v543
    %v545 = vshll.u32 %v536, %v543
    %v546 = vshrl.u32 %v528, %v544
    %v547 = vor.u32 %v545, %v546
    %v548 = vsub.s32 4294967266, %v543
    %v549 = vadd.s32 %v548, 127
    %v550 = vshll.u32 %v549, 23
    %v551 = vor.u32 4788187, %v550
    %v552 = vand.u32 2147483647, %v551
    %v554 = vcvt.s32.f32 %v547
    %v555 = vmul.f32 %v554, %v552
    %v556 = vxor.u32 %v555, 2147483648
    %v557 = vsel %vm436, %v556, %v555
    %v558 = vsub.s32 4, %v534
    %v559 = vsel %vm436, %v558, %v534
    %v560 = vsel %vm435, %v118, %v557
    %v561 = vsel %vm435, 0, %v559
    %v562 = vmul.f32 %v560, %v560
    %v563 = vmul.f32 %v562, -0.001358992
    %v564 = vadd.f32 %v563, 0.041655596
    %v565 = vmul.f32 %v562, %v564
    %v566 = vadd.f32 %v565, -0.4999988
    %v567 = vmul.f32 %v562, %v566
    %v568 = vadd.f32 1.0, %v567
    %v569 = vmul.f32 %v560, %v560
    %v570 = vmul.f32 %v569, -0.00019511016
    %v571 = vadd.f32 %v570, 0.008332121
    %v572 = vmul.f32 %v569, %v571
    %v573 = vadd.f32 %v572, -0.16666654
    %v574 = vmul.f32 %v569, %v573
    %v575 = vadd.f32 %v574, 1.0
    %v576 = vmul.f32 %v575, %v560
    %vm577 = vweird.f32 %v118
    %v578 = vadd.s32 %v561, 3
    %v579 = vand.u32 %v578, 3
    %vm580 = vcmp.lt.s32.totalorder %v579, 2
    %vm581 = vcmp.eq.s32.totalorder %v579, 0
    %v582 = vxor.u32 %v576, 2147483648
    %v583 = vsel %vm581, %v568, %v582
    %vm584 = vcmp.eq.s32.totalorder %v579, 2
    %v585 = vxor.u32 %v568, 2147483648
    %v586 = vsel %vm584, %v585, %v576
    %v587 = vsel %vm580, %v583, %v586
    %v588 = vsel %vm577, nan, %v587
    %v589 = vand.u32 2147483647, %v119
    %vm590 = vcmp.le.f32.partialorder %v589, 0.7853982
    %vm591 = vcmp.lt.s32.totalorder %v119, 0
    %v592 = vand.u32 %v119, 2139095040
    %v593 = vshrl.u32 %v592, 23
    %v594 = vsub.s32 %v593, 127
    %v595 = vand.u32 2147483647, %v119
    %v596 = vand.u32 %v595, 8388607
    %v597 = vor.u32 %v596, 8388608
    %v598 = vsub.s32 0, %v597
    %v599 = vadd.s32 %v594, 1
    %vm600 = vcmp.gt.s32.totalorder %v599, 0
    %v601 = vsel %vm600, %v599, 0
    %v602 = vshrl.u32 %v601, 5
    %v603 = vand.u32 %v601, 31
    %v604 = vsub.s32 32, %v603
    %v605 = vshrl.u32 683565275, %v604
    %v606 = vshll.u32 683565275, %v603
    %v607 = vshrl.u32 2475754826, %v604
    %v608 = vor.u32 %v606, %v607
    %v609 = vshll.u32 2475754826, %v603
    %v610 = vshrl.u32 2131351028, %v604
    %v611 = vor.u32 %v609, %v610
    %v612 = vshll.u32 2131351028, %v603
    %v613 = vshrl.u32 2102212464, %v604
    %v614 = vor.u32 %v612, %v613
    %v615 = vshll.u32 2102212464, %v603
    %v616 = vshrl.u32 920167782, %v604
    %v617 = vor.u32 %v615, %v616
    %v618 = vshll.u32 920167782, %v603
    %v619 = vshrl.u32 1326507024, %v604
    %v620 = vor.u32 %v618, %v619
    %vm621 = vcmp.lt.s32.totalorder %v602, 1
    %vm622 = vcmp.lt.s32.totalorder %v602, 2
    %vm623 = vcmp.lt.s32.totalorder %v602, 3
    %vm624 = vcmp.lt.s32.totalorder %v602, 4
    %v625 = vsel %vm621, %v605, %v608
    %v626 = vsel %vm624, %v614, 2102212464
    %v627 = vsel %vm623, %v611, %v626
    %v628 = vsel %vm622, %v625, %v627
    %v629 = vsel %vm621, %v608, %v611
    %v630 = vsel %vm624, %v617, 920167782
    %v631 = vsel %vm623, %v614, %v630
    %v632 = vsel %vm622, %v629, %v631
    %v633 = vsel %vm621, %v611, %v614
    %v634 = vsel %vm624, %v620, 1326507024
    %v635 = vsel %vm623, %v617, %v634
    %v636 = vsel %vm622, %v633, %v635
    %v637 = vshll.u32 %v597, 8
    %v638 = vand.u32 %v637, 65535
    %v639 = vshrl.u32 %v637, 16
    %v640 = vand.u32 %v636, 65535
    %v641 = vshrl.u32 %v636, 16
    %v642 = vmul.u32 %v638, %v640
    %v643 = vmul.u32 %v638, %v641
    %v644 = vmul.u32 %v639, %v640
    %v645 = vmul.u32 %v639, %v641
    %v646 = vshll.u32 %v643, 16
    %v647 = vshrl.u32 %v643, 16
    %v648 = vshll.u32 %v644, 16
    %v649 = vshrl.u32 %v644, 16
    %vm650 = vc.u32 %v642, %v646
    %v651 = vsel %vm650, 1, 0
    %v652 = vadd.s32 %v642, %v646
    %v653 = vadd.s32 %v645, %v651
    %vm654 = vc.u32 %v652, %v648
    %v655 = vsel %vm654, 1, 0
    %v656 = vadd.s32 %v652, %v648
    %v657 = vadd.s32 %v653, %v655
    %v658 = vadd.s32 %v657, %v647
    %v659 = vadd.s32 %v658, %v649
    %v660 = vand.u32 %v637, 65535
    %v661 = vshrl.u32 %v637, 16
    %v662 = vand.u32 %v632, 65535
    %v663 = vshrl.u32 %v632, 16
    %v664 = vmul.u32 %v660, %v662
    %v665 = vmul.u32 %v660, %v663
    %v666 = vmul.u32 %v661, %v662
    %v667 = vmul.u32 %v661, %v663
    %v668 = vshll.u32 %v665, 16
    %v669 = vshrl.u32 %v665, 16
    %v670 = vshll.u32 %v666, 16
    %v671 = vshrl.u32 %v666, 16
    %vm672 = vc.u32 %v664, %v668
    %v673 = vsel %vm672, 1, 0
    %v674 = vadd.s32 %v664, %v668
    %v675 = vadd.s32 %v667, %v673
    %vm676 = vc.u32 %v674, %v670
    %v677 = vsel %vm676, 1, 0
    %v678 = vadd.s32 %v674, %v670
    %v679 = vadd.s32 %v675, %v677
    %v680 = vadd.s32 %v679, %v669
    %v681 = vadd.s32 %v680, %v671
    %v682 = vmul.u32 %v637, %v628
    %v683 = vadd.s32 %v659, %v678
    %vm684 = vc.u32 %v659, %v678
    %v685 = vadd.s32 %v681, 1
    %v686 = vsel %vm684, %v685, %v681
    %v687 = vadd.s32 %v682, %v686
    %v688 = vadd.s32 %v687, 536870912
    %v689 = vshrl.u32 %v688, 30
    %v690 = vshll.u32 %v689, 30
    %v691 = vsub.s32 %v687, %v690
    %vm692 = vcmp.lt.s32.totalorder %v691, 0
    %v693 = vsub.s32 0, %v691
    %v694 = vsel %vm692, %v693, %v691
    %v695 = vclz %v694
    %v696 = vsub.s32 %v695, 2
    %vm697 = vcmp.gt.s32.totalorder 0, %v696
    %v698 = vsel %vm697, 0, %v696
    %v699 = vsub.s32 32, %v698
    %v700 = vshll.u32 %v691, %v698
    %v701 = vshrl.u32 %v683, %v699
    %v702 = vor.u32 %v700, %v701
    %v703 = vsub.s32 4294967266, %v698
    %v704 = vadd.s32 %v703, 127
    %v705 = vshll.u32 %v704, 23
    %v706 = vor.u32 4788187, %v705
    %v707 = vand.u32 2147483647, %v706
    %v709 = vcvt.s32.f32 %v702
    %v710 = vmul.f32 %v709, %v707
    %v711 = vxor.u32 %v710, 2147483648
    %v712 = vsel %vm591, %v711, %v710
    %v713 = vsub.s32 4, %v689
    %v714 = vsel %vm591, %v713, %v689
    %v715 = vsel %vm590, %v119, %v712
    %v716 = vsel %vm590, 0, %v714
    %v717 = vmul.f32 %v715, %v715
    %v718 = vmul.f32 %v717, -0.001358992
    %v719 = vadd.f32 %v718, 0.041655596
    %v720 = vmul.f32 %v717, %v719
    %v721 = vadd.f32 %v720, -0.4999988
    %v722 = vmul.f32 %v717, %v721
    %v723 = vadd.f32 1.0, %v722
    %v724 = vmul.f32 %v715, %v715
    %v725 = vmul.f32 %v724, -0.00019511016
    %v726 = vadd.f32 %v725, 0.008332121
    %v727 = vmul.f32 %v724, %v726
    %v728 = vadd.f32 %v727, -0.16666654
    %v729 = vmul.f32 %v724, %v728
    %v730 = vadd.f32 %v729, 1.0
    %v731 = vmul.f32 %v730, %v715
    %vm732 = vweird.f32 %v119
    %v733 = vadd.s32 %v716, 3
    %v734 = vand.u32 %v733, 3
    %vm735 = vcmp.lt.s32.totalorder %v734, 2
    %vm736 = vcmp.eq.s32.totalorder %v734, 0
    %v737 = vxor.u32 %v731, 2147483648
    %v738 = vsel %vm736, %v723, %v737
    %vm739 = vcmp.eq.s32.totalorder %v734, 2
    %v740 = vxor.u32 %v723, 2147483648
    %v741 = vsel %vm739, %v740, %v731
    %v742 = vsel %vm735, %v738, %v741
    %v743 = vsel %vm732, nan, %v742
    %v744 = vand.u32 2147483647, %v120
    %vm745 = vcmp.le.f32.partialorder %v744, 0.7853982
    %vm746 = vcmp.lt.s32.totalorder %v120, 0
    %v747 = vand.u32 %v120, 2139095040
    %v748 = vshrl.u32 %v747, 23
    %v749 = vsub.s32 %v748, 127
    %v750 = vand.u32 2147483647, %v120
    %v751 = vand.u32 %v750, 8388607
    %v752 = vor.u32 %v751, 8388608
    %v753 = vsub.s32 0, %v752
    %v754 = vadd.s32 %v749, 1
    %vm755 = vcmp.gt.s32.totalorder %v754, 0
    %v756 = vsel %vm755, %v754, 0
    %v757 = vshrl.u32 %v756, 5
    %v758 = vand.u32 %v756, 31
    %v759 = vsub.s32 32, %v758
    %v760 = vshrl.u32 683565275, %v759
    %v761 = vshll.u32 683565275, %v758
    %v762 = vshrl.u32 2475754826, %v759
    %v763 = vor.u32 %v761, %v762
    %v764 = vshll.u32 2475754826, %v758
    %v765 = vshrl.u32 2131351028, %v759
    %v766 = vor.u32 %v764, %v765
    %v767 = vshll.u32 2131351028, %v758
    %v768 = vshrl.u32 2102212464, %v759
    %v769 = vor.u32 %v767, %v768
    %v770 = vshll.u32 2102212464, %v758
    %v771 = vshrl.u32 920167782, %v759
    %v772 = vor.u32 %v770, %v771
    %v773 = vshll.u32 920167782, %v758
    %v774 = vshrl.u32 1326507024, %v759
    %v775 = vor.u32 %v773, %v774
    %vm776 = vcmp.lt.s32.totalorder %v757, 1
    %vm777 = vcmp.lt.s32.totalorder %v757, 2
    %vm778 = vcmp.lt.s32.totalorder %v757, 3
    %vm779 = vcmp.lt.s32.totalorder %v757, 4
    %v780 = vsel %vm776, %v760, %v763
    %v781 = vsel %vm779, %v769, 2102212464
    %v782 = vsel %vm778, %v766, %v781
    %v783 = vsel %vm777, %v780, %v782
    %v784 = vsel %vm776, %v763, %v766
    %v785 = vsel %vm779, %v772, 920167782
    %v786 = vsel %vm778, %v769, %v785
    %v787 = vsel %vm777, %v784, %v786
    %v788 = vsel %vm776, %v766, %v769
    %v789 = vsel %vm779, %v775, 1326507024
    %v790 = vsel %vm778, %v772, %v789
    %v791 = vsel %vm777, %v788, %v790
    %v792 = vshll.u32 %v752, 8
    %v793 = vand.u32 %v792, 65535
    %v794 = vshrl.u32 %v792, 16
    %v795 = vand.u32 %v791, 65535
    %v796 = vshrl.u32 %v791, 16
    %v797 = vmul.u32 %v793, %v795
    %v798 = vmul.u32 %v793, %v796
    %v799 = vmul.u32 %v794, %v795
    %v800 = vmul.u32 %v794, %v796
    %v801 = vshll.u32 %v798, 16
    %v802 = vshrl.u32 %v798, 16
    %v803 = vshll.u32 %v799, 16
    %v804 = vshrl.u32 %v799, 16
    %vm805 = vc.u32 %v797, %v801
    %v806 = vsel %vm805, 1, 0
    %v807 = vadd.s32 %v797, %v801
    %v808 = vadd.s32 %v800, %v806
    %vm809 = vc.u32 %v807, %v803
    %v810 = vsel %vm809, 1, 0
    %v811 = vadd.s32 %v807, %v803
    %v812 = vadd.s32 %v808, %v810
    %v813 = vadd.s32 %v812, %v802
    %v814 = vadd.s32 %v813, %v804
    %v815 = vand.u32 %v792, 65535
    %v816 = vshrl.u32 %v792, 16
    %v817 = vand.u32 %v787, 65535
    %v818 = vshrl.u32 %v787, 16
    %v819 = vmul.u32 %v815, %v817
    %v820 = vmul.u32 %v815, %v818
    %v821 = vmul.u32 %v816, %v817
    %v822 = vmul.u32 %v816, %v818
    %v823 = vshll.u32 %v820, 16
    %v824 = vshrl.u32 %v820, 16
    %v825 = vshll.u32 %v821, 16
    %v826 = vshrl.u32 %v821, 16
    %vm827 = vc.u32 %v819, %v823
    %v828 = vsel %vm827, 1, 0
    %v829 = vadd.s32 %v819, %v823
    %v830 = vadd.s32 %v822, %v828
    %vm831 = vc.u32 %v829, %v825
    %v832 = vsel %vm831, 1, 0
    %v833 = vadd.s32 %v829, %v825
    %v834 = vadd.s32 %v830, %v832
    %v835 = vadd.s32 %v834, %v824
    %v836 = vadd.s32 %v835, %v826
    %v837 = vmul.u32 %v792, %v783
    %v838 = vadd.s32 %v814, %v833
    %vm839 = vc.u32 %v814, %v833
    %v840 = vadd.s32 %v836, 1
    %v841 = vsel %vm839, %v840, %v836
    %v842 = vadd.s32 %v837, %v841
    %v843 = vadd.s32 %v842, 536870912
    %v844 = vshrl.u32 %v843, 30
    %v845 = vshll.u32 %v844, 30
    %v846 = vsub.s32 %v842, %v845
    %vm847 = vcmp.lt.s32.totalorder %v846, 0
    %v848 = vsub.s32 0, %v846
    %v849 = vsel %vm847, %v848, %v846
    %v850 = vclz %v849
    %v851 = vsub.s32 %v850, 2
    %vm852 = vcmp.gt.s32.totalorder 0, %v851
    %v853 = vsel %vm852, 0, %v851
    %v854 = vsub.s32 32, %v853
    %v855 = vshll.u32 %v846, %v853
    %v856 = vshrl.u32 %v838, %v854
    %v857 = vor.u32 %v855, %v856
    %v858 = vsub.s32 4294967266, %v853
    %v859 = vadd.s32 %v858, 127
    %v860 = vshll.u32 %v859, 23
    %v861 = vor.u32 4788187, %v860
    %v862 = vand.u32 2147483647, %v861
    %v864 = vcvt.s32.f32 %v857
    %v865 = vmul.f32 %v864, %v862
    %v866 = vxor.u32 %v865, 2147483648
    %v867 = vsel %vm746, %v866, %v865
    %v868 = vsub.s32 4, %v844
    %v869 = vsel %vm746, %v868, %v844
    %v870 = vsel %vm745, %v120, %v867
    %v871 = vsel %vm745, 0, %v869
    %v872 = vmul.f32 %v870, %v870
    %v873 = vmul.f32 %v872, -0.001358992
    %v874 = vadd.f32 %v873, 0.041655596
    %v875 = vmul.f32 %v872, %v874
    %v876 = vadd.f32 %v875, -0.4999988
    %v877 = vmul.f32 %v872, %v876
    %v878 = vadd.f32 1.0, %v877
    %v879 = vmul.f32 %v870, %v870
    %v880 = vmul.f32 %v879, -0.00019511016
    %v881 = vadd.f32 %v880, 0.008332121
    %v882 = vmul.f32 %v879, %v881
    %v883 = vadd.f32 %v882, -0.16666654
    %v884 = vmul.f32 %v879, %v883
    %v885 = vadd.f32 %v884, 1.0
    %v886 = vmul.f32 %v885, %v870
    %vm887 = vweird.f32 %v120
    %v888 = vadd.s32 %v871, 3
    %v889 = vand.u32 %v888, 3
    %vm890 = vcmp.lt.s32.totalorder %v889, 2
    %vm891 = vcmp.eq.s32.totalorder %v889, 0
    %v892 = vxor.u32 %v886, 2147483648
    %v893 = vsel %vm891, %v878, %v892
    %vm894 = vcmp.eq.s32.totalorder %v889, 2
    %v895 = vxor.u32 %v878, 2147483648
    %v896 = vsel %vm894, %v895, %v886
    %v897 = vsel %vm890, %v893, %v896
    %v898 = vsel %vm887, nan, %v897
    %v899 = vand.u32 2147483647, %v121
    %vm900 = vcmp.le.f32.partialorder %v899, 0.7853982
    %vm901 = vcmp.lt.s32.totalorder %v121, 0
    %v902 = vand.u32 %v121, 2139095040
    %v903 = vshrl.u32 %v902, 23
    %v904 = vsub.s32 %v903, 127
    %v905 = vand.u32 2147483647, %v121
    %v906 = vand.u32 %v905, 8388607
    %v907 = vor.u32 %v906, 8388608
    %v908 = vsub.s32 0, %v907
    %v909 = vadd.s32 %v904, 1
    %vm910 = vcmp.gt.s32.totalorder %v909, 0
    %v911 = vsel %vm910, %v909, 0
    %v912 = vshrl.u32 %v911, 5
    %v913 = vand.u32 %v911, 31
    %v914 = vsub.s32 32, %v913
    %v915 = vshrl.u32 683565275, %v914
    %v916 = vshll.u32 683565275, %v913
    %v917 = vshrl.u32 2475754826, %v914
    %v918 = vor.u32 %v916, %v917
    %v919 = vshll.u32 2475754826, %v913
    %v920 = vshrl.u32 2131351028, %v914
    %v921 = vor.u32 %v919, %v920
    %v922 = vshll.u32 2131351028, %v913
    %v923 = vshrl.u32 2102212464, %v914
    %v924 = vor.u32 %v922, %v923
    %v925 = vshll.u32 2102212464, %v913
    %v926 = vshrl.u32 920167782, %v914
    %v927 = vor.u32 %v925, %v926
    %v928 = vshll.u32 920167782, %v913
    %v929 = vshrl.u32 1326507024, %v914
    %v930 = vor.u32 %v928, %v929
    %vm931 = vcmp.lt.s32.totalorder %v912, 1
    %vm932 = vcmp.lt.s32.totalorder %v912, 2
    %vm933 = vcmp.lt.s32.totalorder %v912, 3
    %vm934 = vcmp.lt.s32.totalorder %v912, 4
    %v935 = vsel %vm931, %v915, %v918
    %v936 = vsel %vm934, %v924, 2102212464
    %v937 = vsel %vm933, %v921, %v936
    %v938 = vsel %vm932, %v935, %v937
    %v939 = vsel %vm931, %v918, %v921
    %v940 = vsel %vm934, %v927, 920167782
    %v941 = vsel %vm933, %v924, %v940
    %v942 = vsel %vm932, %v939, %v941
    %v943 = vsel %vm931, %v921, %v924
    %v944 = vsel %vm934, %v930, 1326507024
    %v945 = vsel %vm933, %v927, %v944
    %v946 = vsel %vm932, %v943, %v945
    %v947 = vshll.u32 %v907, 8
    %v948 = vand.u32 %v947, 65535
    %v949 = vshrl.u32 %v947, 16
    %v950 = vand.u32 %v946, 65535
    %v951 = vshrl.u32 %v946, 16
    %v952 = vmul.u32 %v948, %v950
    %v953 = vmul.u32 %v948, %v951
    %v954 = vmul.u32 %v949, %v950
    %v955 = vmul.u32 %v949, %v951
    %v956 = vshll.u32 %v953, 16
    %v957 = vshrl.u32 %v953, 16
    %v958 = vshll.u32 %v954, 16
    %v959 = vshrl.u32 %v954, 16
    %vm960 = vc.u32 %v952, %v956
    %v961 = vsel %vm960, 1, 0
    %v962 = vadd.s32 %v952, %v956
    %v963 = vadd.s32 %v955, %v961
    %vm964 = vc.u32 %v962, %v958
    %v965 = vsel %vm964, 1, 0
    %v966 = vadd.s32 %v962, %v958
    %v967 = vadd.s32 %v963, %v965
    %v968 = vadd.s32 %v967, %v957
    %v969 = vadd.s32 %v968, %v959
    %v970 = vand.u32 %v947, 65535
    %v971 = vshrl.u32 %v947, 16
    %v972 = vand.u32 %v942, 65535
    %v973 = vshrl.u32 %v942, 16
    %v974 = vmul.u32 %v970, %v972
    %v975 = vmul.u32 %v970, %v973
    %v976 = vmul.u32 %v971, %v972
    %v977 = vmul.u32 %v971, %v973
    %v978 = vshll.u32 %v975, 16
    %v979 = vshrl.u32 %v975, 16
    %v980 = vshll.u32 %v976, 16
    %v981 = vshrl.u32 %v976, 16
    %vm982 = vc.u32 %v974, %v978
    %v983 = vsel %vm982, 1, 0
    %v984 = vadd.s32 %v974, %v978
    %v985 = vadd.s32 %v977, %v983
    %vm986 = vc.u32 %v984, %v980
    %v987 = vsel %vm986, 1, 0
    %v988 = vadd.s32 %v984, %v980
    %v989 = vadd.s32 %v985, %v987
    %v990 = vadd.s32 %v989, %v979
    %v991 = vadd.s32 %v990, %v981
    %v992 = vmul.u32 %v947, %v938
    %v993 = vadd.s32 %v969, %v988
    %vm994 = vc.u32 %v969, %v988
    %v995 = vadd.s32 %v991, 1
    %v996 = vsel %vm994, %v995, %v991
    %v997 = vadd.s32 %v992, %v996
    %v998 = vadd.s32 %v997, 536870912
    %v999 = vshrl.u32 %v998, 30
    %v1000 = vshll.u32 %v999, 30
    %v1001 = vsub.s32 %v997, %v1000
    %vm1002 = vcmp.lt.s32.totalorder %v1001, 0
    %v1003 = vsub.s32 0, %v1001
    %v1004 = vsel %vm1002, %v1003, %v1001
    %v1005 = vclz %v1004
    %v1006 = vsub.s32 %v1005, 2
    %vm1007 = vcmp.gt.s32.totalorder 0, %v1006
    %v1008 = vsel %vm1007, 0, %v1006
    %v1009 = vsub.s32 32, %v1008
    %v1010 = vshll.u32 %v1001, %v1008
    %v1011 = vshrl.u32 %v993, %v1009
    %v1012 = vor.u32 %v1010, %v1011
    %v1013 = vsub.s32 4294967266, %v1008
    %v1014 = vadd.s32 %v1013, 127
    %v1015 = vshll.u32 %v1014, 23
    %v1016 = vor.u32 4788187, %v1015
    %v1017 = vand.u32 2147483647, %v1016
    %v1019 = vcvt.s32.f32 %v1012
    %v1020 = vmul.f32 %v1019, %v1017
    %v1021 = vxor.u32 %v1020, 2147483648
    %v1022 = vsel %vm901, %v1021, %v1020
    %v1023 = vsub.s32 4, %v999
    %v1024 = vsel %vm901, %v1023, %v999
    %v1025 = vsel %vm900, %v121, %v1022
    %v1026 = vsel %vm900, 0, %v1024
    %v1027 = vmul.f32 %v1025, %v1025
    %v1028 = vmul.f32 %v1027, -0.001358992
    %v1029 = vadd.f32 %v1028, 0.041655596
    %v1030 = vmul.f32 %v1027, %v1029
    %v1031 = vadd.f32 %v1030, -0.4999988
    %v1032 = vmul.f32 %v1027, %v1031
    %v1033 = vadd.f32 1.0, %v1032
    %v1034 = vmul.f32 %v1025, %v1025
    %v1035 = vmul.f32 %v1034, -0.00019511016
    %v1036 = vadd.f32 %v1035, 0.008332121
    %v1037 = vmul.f32 %v1034, %v1036
    %v1038 = vadd.f32 %v1037, -0.16666654
    %v1039 = vmul.f32 %v1034, %v1038
    %v1040 = vadd.f32 %v1039, 1.0
    %v1041 = vmul.f32 %v1040, %v1025
    %vm1042 = vweird.f32 %v121
    %v1043 = vadd.s32 %v1026, 3
    %v1044 = vand.u32 %v1043, 3
    %vm1045 = vcmp.lt.s32.totalorder %v1044, 2
    %vm1046 = vcmp.eq.s32.totalorder %v1044, 0
    %v1047 = vxor.u32 %v1041, 2147483648
    %v1048 = vsel %vm1046, %v1033, %v1047
    %vm1049 = vcmp.eq.s32.totalorder %v1044, 2
    %v1050 = vxor.u32 %v1033, 2147483648
    %v1051 = vsel %vm1049, %v1050, %v1041
    %v1052 = vsel %vm1045, %v1048, %v1051
    %v1053 = vsel %vm1042, nan, %v1052
    %v1054 = vand.u32 2147483647, %v122
    %vm1055 = vcmp.le.f32.partialorder %v1054, 0.7853982
    %vm1056 = vcmp.lt.s32.totalorder %v122, 0
    %v1057 = vand.u32 %v122, 2139095040
    %v1058 = vshrl.u32 %v1057, 23
    %v1059 = vsub.s32 %v1058, 127
    %v1060 = vand.u32 2147483647, %v122
    %v1061 = vand.u32 %v1060, 8388607
    %v1062 = vor.u32 %v1061, 8388608
    %v1063 = vsub.s32 0, %v1062
    %v1064 = vadd.s32 %v1059, 1
    %vm1065 = vcmp.gt.s32.totalorder %v1064, 0
    %v1066 = vsel %vm1065, %v1064, 0
    %v1067 = vshrl.u32 %v1066, 5
    %v1068 = vand.u32 %v1066, 31
    %v1069 = vsub.s32 32, %v1068
    %v1070 = vshrl.u32 683565275, %v1069
    %v1071 = vshll.u32 683565275, %v1068
    %v1072 = vshrl.u32 2475754826, %v1069
    %v1073 = vor.u32 %v1071, %v1072
    %v1074 = vshll.u32 2475754826, %v1068
    %v1075 = vshrl.u32 2131351028, %v1069
    %v1076 = vor.u32 %v1074, %v1075
    %v1077 = vshll.u32 2131351028, %v1068
    %v1078 = vshrl.u32 2102212464, %v1069
    %v1079 = vor.u32 %v1077, %v1078
    %v1080 = vshll.u32 2102212464, %v1068
    %v1081 = vshrl.u32 920167782, %v1069
    %v1082 = vor.u32 %v1080, %v1081
    %v1083 = vshll.u32 920167782, %v1068
    %v1084 = vshrl.u32 1326507024, %v1069
    %v1085 = vor.u32 %v1083, %v1084
    %vm1086 = vcmp.lt.s32.totalorder %v1067, 1
    %vm1087 = vcmp.lt.s32.totalorder %v1067, 2
    %vm1088 = vcmp.lt.s32.totalorder %v1067, 3
    %vm1089 = vcmp.lt.s32.totalorder %v1067, 4
    %v1090 = vsel %vm1086, %v1070, %v1073
    %v1091 = vsel %vm1089, %v1079, 2102212464
    %v1092 = vsel %vm1088, %v1076, %v1091
    %v1093 = vsel %vm1087, %v1090, %v1092
    %v1094 = vsel %vm1086, %v1073, %v1076
    %v1095 = vsel %vm1089, %v1082, 920167782
    %v1096 = vsel %vm1088, %v1079, %v1095
    %v1097 = vsel %vm1087, %v1094, %v1096
    %v1098 = vsel %vm1086, %v1076, %v1079
    %v1099 = vsel %vm1089, %v1085, 1326507024
    %v1100 = vsel %vm1088, %v1082, %v1099
    %v1101 = vsel %vm1087, %v1098, %v1100
    %v1102 = vshll.u32 %v1062, 8
    %v1103 = vand.u32 %v1102, 65535
    %v1104 = vshrl.u32 %v1102, 16
    %v1105 = vand.u32 %v1101, 65535
    %v1106 = vshrl.u32 %v1101, 16
    %v1107 = vmul.u32 %v1103, %v1105
    %v1108 = vmul.u32 %v1103, %v1106
    %v1109 = vmul.u32 %v1104, %v1105
    %v1110 = vmul.u32 %v1104, %v1106
    %v1111 = vshll.u32 %v1108, 16
    %v1112 = vshrl.u32 %v1108, 16
    %v1113 = vshll.u32 %v1109, 16
    %v1114 = vshrl.u32 %v1109, 16
    %vm1115 = vc.u32 %v1107, %v1111
    %v1116 = vsel %vm1115, 1, 0
    %v1117 = vadd.s32 %v1107, %v1111
    %v1118 = vadd.s32 %v1110, %v1116
    %vm1119 = vc.u32 %v1117, %v1113
    %v1120 = vsel %vm1119, 1, 0
    %v1121 = vadd.s32 %v1117, %v1113
    %v1122 = vadd.s32 %v1118, %v1120
    %v1123 = vadd.s32 %v1122, %v1112
    %v1124 = vadd.s32 %v1123, %v1114
    %v1125 = vand.u32 %v1102, 65535
    %v1126 = vshrl.u32 %v1102, 16
    %v1127 = vand.u32 %v1097, 65535
    %v1128 = vshrl.u32 %v1097, 16
    %v1129 = vmul.u32 %v1125, %v1127
    %v1130 = vmul.u32 %v1125, %v1128
    %v1131 = vmul.u32 %v1126, %v1127
    %v1132 = vmul.u32 %v1126, %v1128
    %v1133 = vshll.u32 %v1130, 16
    %v1134 = vshrl.u32 %v1130, 16
    %v1135 = vshll.u32 %v1131, 16
    %v1136 = vshrl.u32 %v1131, 16
    %vm1137 = vc.u32 %v1129, %v1133
    %v1138 = vsel %vm1137, 1, 0
    %v1139 = vadd.s32 %v1129, %v1133
    %v1140 = vadd.s32 %v1132, %v1138
    %vm1141 = vc.u32 %v1139, %v1135
    %v1142 = vsel %vm1141, 1, 0
    %v1143 = vadd.s32 %v1139, %v1135
    %v1144 = vadd.s32 %v1140, %v1142
    %v1145 = vadd.s32 %v1144, %v1134
    %v1146 = vadd.s32 %v1145, %v1136
    %v1147 = vmul.u32 %v1102, %v1093
    %v1148 = vadd.s32 %v1124, %v1143
    %vm1149 = vc.u32 %v1124, %v1143
    %v1150 = vadd.s32 %v1146, 1
    %v1151 = vsel %vm1149, %v1150, %v1146
    %v1152 = vadd.s32 %v1147, %v1151
    %v1153 = vadd.s32 %v1152, 536870912
    %v1154 = vshrl.u32 %v1153, 30
    %v1155 = vshll.u32 %v1154, 30
    %v1156 = vsub.s32 %v1152, %v1155
    %vm1157 = vcmp.lt.s32.totalorder %v1156, 0
    %v1158 = vsub.s32 0, %v1156
    %v1159 = vsel %vm1157, %v1158, %v1156
    %v1160 = vclz %v1159
    %v1161 = vsub.s32 %v1160, 2
    %vm1162 = vcmp.gt.s32.totalorder 0, %v1161
    %v1163 = vsel %vm1162, 0, %v1161
    %v1164 = vsub.s32 32, %v1163
    %v1165 = vshll.u32 %v1156, %v1163
    %v1166 = vshrl.u32 %v1148, %v1164
    %v1167 = vor.u32 %v1165, %v1166
    %v1168 = vsub.s32 4294967266, %v1163
    %v1169 = vadd.s32 %v1168, 127
    %v1170 = vshll.u32 %v1169, 23
    %v1171 = vor.u32 4788187, %v1170
    %v1172 = vand.u32 2147483647, %v1171
    %v1174 = vcvt.s32.f32 %v1167
    %v1175 = vmul.f32 %v1174, %v1172
    %v1176 = vxor.u32 %v1175, 2147483648
    %v1177 = vsel %vm1056, %v1176, %v1175
    %v1178 = vsub.s32 4, %v1154
    %v1179 = vsel %vm1056, %v1178, %v1154
    %v1180 = vsel %vm1055, %v122, %v1177
    %v1181 = vsel %vm1055, 0, %v1179
    %v1182 = vmul.f32 %v1180, %v1180
    %v1183 = vmul.f32 %v1182, -0.001358992
    %v1184 = vadd.f32 %v1183, 0.041655596
    %v1185 = vmul.f32 %v1182, %v1184
    %v1186 = vadd.f32 %v1185, -0.4999988
    %v1187 = vmul.f32 %v1182, %v1186
    %v1188 = vadd.f32 1.0, %v1187
    %v1189 = vmul.f32 %v1180, %v1180
    %v1190 = vmul.f32 %v1189, -0.00019511016
    %v1191 = vadd.f32 %v1190, 0.008332121
    %v1192 = vmul.f32 %v1189, %v1191
    %v1193 = vadd.f32 %v1192, -0.16666654
    %v1194 = vmul.f32 %v1189, %v1193
    %v1195 = vadd.f32 %v1194, 1.0
    %v1196 = vmul.f32 %v1195, %v1180
    %vm1197 = vweird.f32 %v122
    %v1198 = vadd.s32 %v1181, 3
    %v1199 = vand.u32 %v1198, 3
    %vm1200 = vcmp.lt.s32.totalorder %v1199, 2
    %vm1201 = vcmp.eq.s32.totalorder %v1199, 0
    %v1202 = vxor.u32 %v1196, 2147483648
    %v1203 = vsel %vm1201, %v1188, %v1202
    %vm1204 = vcmp.eq.s32.totalorder %v1199, 2
    %v1205 = vxor.u32 %v1188, 2147483648
    %v1206 = vsel %vm1204, %v1205, %v1196
    %v1207 = vsel %vm1200, %v1203, %v1206
    %v1208 = vsel %vm1197, nan, %v1207
    %v1209 = vand.u32 2147483647, %v123
    %vm1210 = vcmp.le.f32.partialorder %v1209, 0.7853982
    %vm1211 = vcmp.lt.s32.totalorder %v123, 0
    %v1212 = vand.u32 %v123, 2139095040
    %v1213 = vshrl.u32 %v1212, 23
    %v1214 = vsub.s32 %v1213, 127
    %v1215 = vand.u32 2147483647, %v123
    %v1216 = vand.u32 %v1215, 8388607
    %v1217 = vor.u32 %v1216, 8388608
    %v1218 = vsub.s32 0, %v1217
    %v1219 = vadd.s32 %v1214, 1
    %vm1220 = vcmp.gt.s32.totalorder %v1219, 0
    %v1221 = vsel %vm1220, %v1219, 0
    %v1222 = vshrl.u32 %v1221, 5
    %v1223 = vand.u32 %v1221, 31
    %v1224 = vsub.s32 32, %v1223
    %v1225 = vshrl.u32 683565275, %v1224
    %v1226 = vshll.u32 683565275, %v1223
    %v1227 = vshrl.u32 2475754826, %v1224
    %v1228 = vor.u32 %v1226, %v1227
    %v1229 = vshll.u32 2475754826, %v1223
    %v1230 = vshrl.u32 2131351028, %v1224
    %v1231 = vor.u32 %v1229, %v1230
    %v1232 = vshll.u32 2131351028, %v1223
    %v1233 = vshrl.u32 2102212464, %v1224
    %v1234 = vor.u32 %v1232, %v1233
    %v1235 = vshll.u32 2102212464, %v1223
    %v1236 = vshrl.u32 920167782, %v1224
    %v1237 = vor.u32 %v1235, %v1236
    %v1238 = vshll.u32 920167782, %v1223
    %v1239 = vshrl.u32 1326507024, %v1224
    %v1240 = vor.u32 %v1238, %v1239
    %vm1241 = vcmp.lt.s32.totalorder %v1222, 1
    %vm1242 = vcmp.lt.s32.totalorder %v1222, 2
    %vm1243 = vcmp.lt.s32.totalorder %v1222, 3
    %vm1244 = vcmp.lt.s32.totalorder %v1222, 4
    %v1245 = vsel %vm1241, %v1225, %v1228
    %v1246 = vsel %vm1244, %v1234, 2102212464
    %v1247 = vsel %vm1243, %v1231, %v1246
    %v1248 = vsel %vm1242, %v1245, %v1247
    %v1249 = vsel %vm1241, %v1228, %v1231
    %v1250 = vsel %vm1244, %v1237, 920167782
    %v1251 = vsel %vm1243, %v1234, %v1250
    %v1252 = vsel %vm1242, %v1249, %v1251
    %v1253 = vsel %vm1241, %v1231, %v1234
    %v1254 = vsel %vm1244, %v1240, 1326507024
    %v1255 = vsel %vm1243, %v1237, %v1254
    %v1256 = vsel %vm1242, %v1253, %v1255
    %v1257 = vshll.u32 %v1217, 8
    %v1258 = vand.u32 %v1257, 65535
    %v1259 = vshrl.u32 %v1257, 16
    %v1260 = vand.u32 %v1256, 65535
    %v1261 = vshrl.u32 %v1256, 16
    %v1262 = vmul.u32 %v1258, %v1260
    %v1263 = vmul.u32 %v1258, %v1261
    %v1264 = vmul.u32 %v1259, %v1260
    %v1265 = vmul.u32 %v1259, %v1261
    %v1266 = vshll.u32 %v1263, 16
    %v1267 = vshrl.u32 %v1263, 16
    %v1268 = vshll.u32 %v1264, 16
    %v1269 = vshrl.u32 %v1264, 16
    %vm1270 = vc.u32 %v1262, %v1266
    %v1271 = vsel %vm1270, 1, 0
    %v1272 = vadd.s32 %v1262, %v1266
    %v1273 = vadd.s32 %v1265, %v1271
    %vm1274 = vc.u32 %v1272, %v1268
    %v1275 = vsel %vm1274, 1, 0
    %v1276 = vadd.s32 %v1272, %v1268
    %v1277 = vadd.s32 %v1273, %v1275
    %v1278 = vadd.s32 %v1277, %v1267
    %v1279 = vadd.s32 %v1278, %v1269
    %v1280 = vand.u32 %v1257, 65535
    %v1281 = vshrl.u32 %v1257, 16
    %v1282 = vand.u32 %v1252, 65535
    %v1283 = vshrl.u32 %v1252, 16
    %v1284 = vmul.u32 %v1280, %v1282
    %v1285 = vmul.u32 %v1280, %v1283
    %v1286 = vmul.u32 %v1281, %v1282
    %v1287 = vmul.u32 %v1281, %v1283
    %v1288 = vshll.u32 %v1285, 16
    %v1289 = vshrl.u32 %v1285, 16
    %v1290 = vshll.u32 %v1286, 16
    %v1291 = vshrl.u32 %v1286, 16
    %vm1292 = vc.u32 %v1284, %v1288
    %v1293 = vsel %vm1292, 1, 0
    %v1294 = vadd.s32 %v1284, %v1288
    %v1295 = vadd.s32 %v1287, %v1293
    %vm1296 = vc.u32 %v1294, %v1290
    %v1297 = vsel %vm1296, 1, 0
    %v1298 = vadd.s32 %v1294, %v1290
    %v1299 = vadd.s32 %v1295, %v1297
    %v1300 = vadd.s32 %v1299, %v1289
    %v1301 = vadd.s32 %v1300, %v1291
    %v1302 = vmul.u32 %v1257, %v1248
    %v1303 = vadd.s32 %v1279, %v1298
    %vm1304 = vc.u32 %v1279, %v1298
    %v1305 = vadd.s32 %v1301, 1
    %v1306 = vsel %vm1304, %v1305, %v1301
    %v1307 = vadd.s32 %v1302, %v1306
    %v1308 = vadd.s32 %v1307, 536870912
    %v1309 = vshrl.u32 %v1308, 30
    %v1310 = vshll.u32 %v1309, 30
    %v1311 = vsub.s32 %v1307, %v1310
    %vm1312 = vcmp.lt.s32.totalorder %v1311, 0
    %v1313 = vsub.s32 0, %v1311
    %v1314 = vsel %vm1312, %v1313, %v1311
    %v1315 = vclz %v1314
    %v1316 = vsub.s32 %v1315, 2
    %vm1317 = vcmp.gt.s32.totalorder 0, %v1316
    %v1318 = vsel %vm1317, 0, %v1316
    %v1319 = vsub.s32 32, %v1318
    %v1320 = vshll.u32 %v1311, %v1318
    %v1321 = vshrl.u32 %v1303, %v1319
    %v1322 = vor.u32 %v1320, %v1321
    %v1323 = vsub.s32 4294967266, %v1318
    %v1324 = vadd.s32 %v1323, 127
    %v1325 = vshll.u32 %v1324, 23
    %v1326 = vor.u32 4788187, %v1325
    %v1327 = vand.u32 2147483647, %v1326
    %v1329 = vcvt.s32.f32 %v1322
    %v1330 = vmul.f32 %v1329, %v1327
    %v1331 = vxor.u32 %v1330, 2147483648
    %v1332 = vsel %vm1211, %v1331, %v1330
    %v1333 = vsub.s32 4, %v1309
    %v1334 = vsel %vm1211, %v1333, %v1309
    %v1335 = vsel %vm1210, %v123, %v1332
    %v1336 = vsel %vm1210, 0, %v1334
    %v1337 = vmul.f32 %v1335, %v1335
    %v1338 = vmul.f32 %v1337, -0.001358992
    %v1339 = vadd.f32 %v1338, 0.041655596
    %v1340 = vmul.f32 %v1337, %v1339
    %v1341 = vadd.f32 %v1340, -0.4999988
    %v1342 = vmul.f32 %v1337, %v1341
    %v1343 = vadd.f32 1.0, %v1342
    %v1344 = vmul.f32 %v1335, %v1335
    %v1345 = vmul.f32 %v1344, -0.00019511016
    %v1346 = vadd.f32 %v1345, 0.008332121
    %v1347 = vmul.f32 %v1344, %v1346
    %v1348 = vadd.f32 %v1347, -0.16666654
    %v1349 = vmul.f32 %v1344, %v1348
    %v1350 = vadd.f32 %v1349, 1.0
    %v1351 = vmul.f32 %v1350, %v1335
    %vm1352 = vweird.f32 %v123
    %v1353 = vadd.s32 %v1336, 3
    %v1354 = vand.u32 %v1353, 3
    %vm1355 = vcmp.lt.s32.totalorder %v1354, 2
    %vm1356 = vcmp.eq.s32.totalorder %v1354, 0
    %v1357 = vxor.u32 %v1351, 2147483648
    %v1358 = vsel %vm1356, %v1343, %v1357
    %vm1359 = vcmp.eq.s32.totalorder %v1354, 2
    %v1360 = vxor.u32 %v1343, 2147483648
    %v1361 = vsel %vm1359, %v1360, %v1351
    %v1362 = vsel %vm1355, %v1358, %v1361
    %v1363 = vsel %vm1352, nan, %v1362
    %1364 = vst [vmem:[#allocation7] sm:$0xff] %v278
    %1365 = vst [vmem:[#allocation7 + $0x8] sm:$0xff] %v433
    %1366 = vst [vmem:[#allocation7 + $0x10] sm:$0xff] %v588
    %1367 = vst [vmem:[#allocation7 + $0x18] sm:$0xff] %v743
    %1368 = vst [vmem:[#allocation7 + $0x20] sm:$0xff] %v898
    %1369 = vst [vmem:[#allocation7 + $0x28] sm:$0xff] %v1053
    %1370 = vst [vmem:[#allocation7 + $0x30] sm:$0xff] %v1208
    %1371 = vst [vmem:[#allocation7 + $0x38] sm:$0xff] %v1363
    // Predicated region
    $region22: #{tpu_custom_call.1} parent=1 // pred_check
      _
    $region23: #{tpu_custom_call.1} parent=1 // pred_check_branch
      %1373 = sbr.rel (0) target = $region25
    $region24: #{tpu_custom_call.1} parent=1 // pred_region
      %1375 = vsyncadd [#allocation4], 0
      %s1376 = sshll.u32 [#allocation7], 4
      %s1377 = int_to_ptr.vmem [resolvable:$true] %s1376
      %s1378 = sshll.u32 %s3, 4
      %s1379 = int_to_ptr.hbm [resolvable:$true] %s1378
      %1384 = dma.vmem_to_hbm [thread:$0]  %s1377, 1024, %s1379, [#allocation4], 128, 128, 8
    $region25: #{tpu_custom_call.1} parent=1 // pred_fallthru
      _
    // Predicated region
    $region26: #{tpu_custom_call.1} parent=1 // pred_check
      _
    $region27: #{tpu_custom_call.1} parent=1 // pred_check_branch
      %1386 = sbr.rel (0) target = $region29
    $region28: #{tpu_custom_call.1} parent=1 // pred_region
      %1388 = dma.done [#allocation4], 1024
    $region29: #{tpu_custom_call.1} parent=1 // pred_fallthru
      _
    %1389 = vsyncpa [#allocation3], 1
    %1390 = vsyncpa [#allocation6], 1
    %1391 = vsyncpa [#allocation4], 1

</llo_original>
